<compile_context>
chip_gen: v6e
topology: v6e:2x2x1
jax: 0.10.0
libtpu: 0.0.40
codegen_flags: <defaults>
</compile_context>

<pallas_src>
import functools

import jax
import jax.numpy as jnp
from jax import lax
from jax.experimental import pallas as pl
from jax.experimental.pallas import tpu as pltpu


def _round_up(x, m):
    return (x + m - 1) // m * m


def _cdiv(a, b):
    return -(-a // b)


def _tpu_caps():
    """(vmem_capacity_bytes, num_tensorcores) with conservative fallbacks."""
    vmem_cap = 64 << 20            # conservative (v7x-sized) fallback
    num_tc = 1
    try:
        info = pltpu.get_tpu_info()
        vmem_cap = int(getattr(info, "vmem_capacity_bytes", vmem_cap))
    except Exception:
        pass
    try:
        if "v7" in jax.devices()[0].device_kind.lower():
            num_tc = 2             # v7x: 2 TensorCores per chip
    except Exception:
        pass
    return vmem_cap, num_tc


# --------------------------------- kernels --------------------------------- #

def _mlp_kernel_fused(x_ref, w1_ref, b1_ref, w2_ref, b2_ref, o_ref, *, precision):
    """o = relu(x @ w1 + b1) @ w2 + b2 for one (tb, in_dim) tile of x (weights resident)."""
    mm_dtype = w1_ref.dtype
    x = x_ref[...].astype(mm_dtype)
    h = jnp.dot(x, w1_ref[...], preferred_element_type=jnp.float32,
                precision=precision)
    # NOTE: for very large tb*hidden on v7x, h could be kept in bf16 right after
    # the accumulate to halve its VMEM/vreg footprint (optional accuracy trade).
    h = jnp.maximum(h + b1_ref[...], 0.0)            # bias + ReLU in f32 (VPU)
    o = jnp.dot(h.astype(mm_dtype), w2_ref[...],
                preferred_element_type=jnp.float32, precision=precision)
    o_ref[...] = (o + b2_ref[...]).astype(o_ref.dtype)


def _mlp_kernel_htiled(x_ref, w1_ref, b1_ref, w2_ref, b2_ref, o_ref, acc_ref, *,
                       precision):
    """acc += relu(x @ w1[:, j-tile] + b1[j-tile]) @ w2[j-tile, :]; +b2/store at last j."""
    j = pl.program_id(1)

    @pl.when(j == 0)
    def _init():
        acc_ref[...] = jnp.zeros_like(acc_ref)

    mm_dtype = w1_ref.dtype
    x = x_ref[...].astype(mm_dtype)
    h = jnp.dot(x, w1_ref[...], preferred_element_type=jnp.float32,
                precision=precision)
    h = jnp.maximum(h + b1_ref[...], 0.0)
    acc_ref[...] += jnp.dot(h.astype(mm_dtype), w2_ref[...],
                            preferred_element_type=jnp.float32,
                            precision=precision)

    @pl.when(j == pl.num_programs(1) - 1)
    def _fin():
        o_ref[...] = (acc_ref[...] + b2_ref[...]).astype(o_ref.dtype)


# --------------------------------- wrapper ---------------------------------- #

@functools.partial(
    jax.jit,
    static_argnames=("matmul_dtype", "high_precision", "tb", "hidden_tile",
                     "force_hidden_tiling", "use_buffered_hints"))
def mlp_projection(x, w1, b1, w2, b2, *, matmul_dtype=jnp.bfloat16,
                   high_precision=False, tb=None, hidden_tile=None,
                   force_hidden_tiling=False, use_buffered_hints=True):
    """y = relu(x @ w1 + b1) @ w2 + b2 fused in one Pallas TPU kernel.

    x  : (B, in_dim)
    w1 : (in_dim, hidden)   b1 : (hidden,) or (1, hidden)
    w2 : (hidden, out_dim)  b2 : (out_dim,) or (1, out_dim)
    matmul_dtype   : MXU input dtype (default bf16).  Accumulation, bias add
                     and ReLU always run in float32.
    high_precision : run the MXU on f32 inputs with Precision.HIGHEST.
    """
    B, in_dim = x.shape
    hidden = w1.shape[1]
    out_dim = w2.shape[1]
    out_dtype = x.dtype

    vmem_cap, num_tc = _tpu_caps()

    if high_precision:
        mm_dtype = jnp.dtype(jnp.float32)
        precision = lax.Precision.HIGHEST
    else:
        mm_dtype = jnp.dtype(matmul_dtype)
        precision = None

    w1c = w1.astype(mm_dtype)
    w2c = w2.astype(mm_dtype)
    b1c = jnp.asarray(b1, jnp.float32).reshape(1, hidden)
    b2c = jnp.asarray(b2, jnp.float32).reshape(1, out_dim)

    # ---- Batch tiling (generation-aware). --------------------------------- #
    b8 = _round_up(B, 8)
    if tb is None:
        if num_tc == 1:
            # v5e/v6e: single TC, 128 MiB VMEM -> big tiles, few grid steps.
            n_steps = max(1, _cdiv(b8, 512))
        else:
            # v7x: guarantee >= 2 "parallel" steps so both TensorCores run.
            n_steps = 1 if b8 <= 128 else max(2, _cdiv(b8, 256))
        tb = _round_up(_cdiv(b8, n_steps), 8)
    b_pad = _round_up(B, tb)

    # ---- Lane-dense output: pad out_dim to a multiple of 128. ------------- #
    out_pad = _round_up(out_dim, 128)
    if b_pad != B:
        x = jnp.pad(x, ((0, b_pad - B), (0, 0)))
    if out_pad != out_dim:
        w2c = jnp.pad(w2c, ((0, 0), (0, out_pad - out_dim)))
        b2c = jnp.pad(b2c, ((0, 0), (0, out_pad - out_dim)))

    mm_item = jnp.dtype(mm_dtype).itemsize
    x_item = jnp.dtype(x.dtype).itemsize
    o_item = jnp.dtype(out_dtype).itemsize
    weight_bytes = (in_dim * hidden + hidden * out_pad) * mm_item
    bias_bytes = (hidden + out_pad) * 4

    # Hidden-axis reduction only when keeping both weights resident would not
    # comfortably fit VMEM (mainly v7x / very large hidden*out_dim).
    use_htiled = bool(force_hidden_tiling) or weight_bytes > int(0.4 * vmem_cap)

    n_bsteps = b_pad // tb
    per_step_flops = 2 * tb * (in_dim * hidden + hidden * out_pad)
    x_bufs = 3 if (use_buffered_hints and n_bsteps >= 3
                   and per_step_flops < (8 << 20)) else 2

    def _spec(shape, index_map, buffers=None):
        if buffers is not None and use_buffered_hints:
            return pl.BlockSpec(shape, index_map,
                                pipeline_mode=pl.Buffered(buffers))
        return pl.BlockSpec(shape, index_map)

    if not use_htiled:
        grid = (n_bsteps,)
        in_specs = [
            _spec((tb, in_dim), lambda i: (i, 0),
                  buffers=x_bufs if x_bufs != 2 else None),       # x (streamed)
            _spec((in_dim, hidden), lambda i: (0, 0), buffers=1),  # w1 resident
            _spec((1, hidden), lambda i: (0, 0), buffers=1),       # b1 resident
            _spec((hidden, out_pad), lambda i: (0, 0), buffers=1), # w2 resident
            _spec((1, out_pad), lambda i: (0, 0), buffers=1),      # b2 resident
        ]
        out_specs = pl.BlockSpec((tb, out_pad), lambda i: (i, 0))
        scratch_shapes = []
        dims = ("parallel",)
        kernel = functools.partial(_mlp_kernel_fused, precision=precision)

        w_bufs = 1 if use_buffered_hints else 2
        vmem_budget = (w_bufs * (weight_bytes + bias_bytes)
                       + x_bufs * tb * in_dim * x_item
                       + 2 * tb * out_pad * o_item
                       + tb * hidden * 4             # f32 intermediate h
                       + (4 << 20))
        hidden_used = hidden
    else:
        th = hidden_tile if hidden_tile is not None else min(
            _round_up(hidden, 128), 512)
        th = max(128, _round_up(th, 128))             # lane constraint on w1 tile
        hidden_pad = _round_up(hidden, th)
        if hidden_pad != hidden:
            # Zero-padding the hidden axis is exact: padded w2 rows are zero, so
            # padded hidden units contribute nothing to the output.
            w1c = jnp.pad(w1c, ((0, 0), (0, hidden_pad - hidden)))
            b1c = jnp.pad(b1c, ((0, 0), (0, hidden_pad - hidden)))
            w2c = jnp.pad(w2c, ((0, hidden_pad - hidden), (0, 0)))
        grid = (n_bsteps, hidden_pad // th)
        in_specs = [
            _spec((tb, in_dim), lambda i, j: (i, 0),
                  buffers=x_bufs if x_bufs != 2 else None),        # x
            pl.BlockSpec((in_dim, th), lambda i, j: (0, j)),        # w1 tile
            pl.BlockSpec((1, th), lambda i, j: (0, j)),             # b1 tile
            pl.BlockSpec((th, out_pad), lambda i, j: (j, 0)),       # w2 tile
            _spec((1, out_pad), lambda i, j: (0, 0), buffers=1),    # b2 resident
        ]
        out_specs = pl.BlockSpec((tb, out_pad), lambda i, j: (i, 0))
        scratch_shapes = [pltpu.VMEM((tb, out_pad), jnp.float32)]
        dims = ("parallel", "arbitrary")
        kernel = functools.partial(_mlp_kernel_htiled, precision=precision)

        tile_w_bytes = (in_dim * th + th * out_pad) * mm_item + th * 4
        vmem_budget = (2 * tile_w_bytes
                       + x_bufs * tb * in_dim * x_item
                       + 2 * tb * out_pad * o_item
                       + tb * out_pad * 4             # f32 accumulator scratch
                       + tb * th * 4                  # f32 intermediate h tile
                       + out_pad * 4
                       + (4 << 20))
        hidden_used = hidden_pad

    # Per-generation VMEM cap (not a universal 64 MiB clamp); leave 8 MiB
    # headroom for compiler scratch.
    vmem_limit = int(min(max(vmem_budget, 16 << 20), vmem_cap - (8 << 20)))
    vmem_limit = max(vmem_limit, 8 << 20)

    flops = 2 * b_pad * (in_dim * hidden_used + hidden_used * out_pad)
    bytes_accessed = int(b_pad * in_dim * x_item
                         + (in_dim * hidden_used + hidden_used * out_pad) * mm_item
                         + (hidden_used + out_pad) * 4
                         + b_pad * out_pad * o_item)
    cost = pl.CostEstimate(flops=flops, transcendentals=0,
                           bytes_accessed=bytes_accessed)

    y = pl.pallas_call(
        kernel,
        out_shape=jax.ShapeDtypeStruct((b_pad, out_pad), out_dtype),
        grid_spec=pltpu.PrefetchScalarGridSpec(
            num_scalar_prefetch=0,
            grid=grid,
            in_specs=in_specs,
            out_specs=out_specs,
            scratch_shapes=scratch_shapes,
        ),
        compiler_params=pltpu.CompilerParams(
            dimension_semantics=dims,
            vmem_limit_bytes=vmem_limit),
        cost_estimate=cost,
    )(x, w1c, b1c, w2c, b2c)

    # TODO(synk): optional int8 (v5e/v6e) / fp8 (v7x) weight paths with
    # per-channel scales applied in f32 after the MXU; not added here.
    return y[:B, :out_dim]


if __name__ == "__main__":
    key = jax.random.PRNGKey(0)
    kx, kw1, kb1, kw2, kb2, kw1b, kw2b = jax.random.split(key, 7)

    # Shapes consistent with MLPProjection(in_dim=32, out_dim=64, hidden_dim=128).
    B, IN_DIM, HIDDEN, OUT_DIM = 16, 32, 128, 64

    x = jax.random.normal(kx, (B, IN_DIM), dtype=jnp.float32)
    # PyTorch stores Linear weight as (out, in); built here pre-transposed (in, out).
    w1 = jax.random.normal(kw1, (IN_DIM, HIDDEN), jnp.float32) * IN_DIM ** -0.5
    b1 = jax.random.normal(kb1, (HIDDEN,), jnp.float32) * 0.01
    w2 = jax.random.normal(kw2, (HIDDEN, OUT_DIM), jnp.float32) * HIDDEN ** -0.5
    b2 = jax.random.normal(kb2, (OUT_DIM,), jnp.float32) * 0.01

    def ref(xx, a1, c1, a2, c2):
        return jnp.maximum(xx @ a1 + c1, 0.0) @ a2 + c2

    def run(xx, a1, c1, a2, c2, **kw):
        try:
            out = mlp_projection(xx, a1, c1, a2, c2, **kw)
        except Exception:
            # pl.Buffered hints unsupported on this jax build -> retry with
            # default double-buffering (identical numerics, just more VMEM).
            out = mlp_projection(xx, a1, c1, a2, c2,
                                 use_buffered_hints=False, **kw)
        jax.block_until_ready(out)
        return out

    y_ref = ref(x, w1, b1, w2, b2)

    # 1) Default path: bf16 MXU inputs, f32 accumulation / bias / ReLU.
    y = run(x, w1, b1, w2, b2)
    assert y.shape == (B, OUT_DIM)
    assert float(jnp.max(jnp.abs(y - y_ref))) < 0.25

    # 2) High-precision path: f32 MXU inputs with Precision.HIGHEST.
    y_hp = run(x, w1, b1, w2, b2, high_precision=True)
    assert jnp.allclose(y_hp, y_ref, atol=1e-4, rtol=1e-4)

    # 3) Hidden-axis reduction path (the large-weight / v7x path), exercised at
    #    small scale: hidden=256 split into two 128-wide tiles -> 2 grid steps.
    HIDDEN2 = 256
    w1b = jax.random.normal(kw1b, (IN_DIM, HIDDEN2), jnp.float32) * IN_DIM ** -0.5
    b1b = jax.random.normal(kb1, (HIDDEN2,), jnp.float32) * 0.01
    w2b = jax.random.normal(kw2b, (HIDDEN2, OUT_DIM), jnp.float32) * HIDDEN2 ** -0.5
    y2_ref = ref(x, w1b, b1b, w2b, b2)
    y2 = run(x, w1b, b1b, w2b, b2, high_precision=True,
             force_hidden_tiling=True, hidden_tile=128)
    assert y2.shape == (B, OUT_DIM)
    assert jnp.allclose(y2, y2_ref, atol=1e-4, rtol=1e-4)

    print("KERNEL_OK")
</pallas_src>

<mosaic_0001>
module attributes {stable_mosaic.version = 11 : i64} {
  func.func @_mlp_kernel_fused(%arg0: i32, %arg1: memref<16x32xf32, #tpu.memory_space<vmem>>, %arg2: memref<32x128xbf16, #tpu.memory_space<vmem>>, %arg3: memref<1x128xf32, #tpu.memory_space<vmem>>, %arg4: memref<128x128xbf16, #tpu.memory_space<vmem>>, %arg5: memref<1x128xf32, #tpu.memory_space<vmem>>, %arg6: memref<16x128xf32, #tpu.memory_space<vmem>>) attributes {dimension_semantics = [#tpu.dimension_semantics<parallel>], iteration_bounds = array<i64: 1>, scalar_prefetch = 0 : i64, scratch_operands = 0 : i64, tpu.core_type = #tpu.core_type<tc>, window_params = [{transform_indices = @transform_0, window_bounds = array<i64: 16, 32>}, {pipeline_mode = #tpu.pipeline_mode<synchronous>, transform_indices = @transform_1, window_bounds = array<i64: 32, 128>}, {pipeline_mode = #tpu.pipeline_mode<synchronous>, transform_indices = @transform_2, window_bounds = array<i64: 1, 128>}, {pipeline_mode = #tpu.pipeline_mode<synchronous>, transform_indices = @transform_3, window_bounds = array<i64: 128, 128>}, {pipeline_mode = #tpu.pipeline_mode<synchronous>, transform_indices = @transform_4, window_bounds = array<i64: 1, 128>}, {transform_indices = @transform_5, window_bounds = array<i64: 16, 128>}]} {
    %c0 = arith.constant 0 : index
    %c0_0 = arith.constant 0 : index
    %0 = vector.load %arg1[%c0, %c0_0] : memref<16x32xf32, #tpu.memory_space<vmem>>, vector<16x32xf32>
    %1 = arith.truncf %0 : vector<16x32xf32> to vector<16x32xbf16>
    %c0_1 = arith.constant 0 : index
    %c0_2 = arith.constant 0 : index
    %2 = vector.load %arg2[%c0_1, %c0_2] : memref<32x128xbf16, #tpu.memory_space<vmem>>, vector<32x128xbf16>
    %cst = arith.constant dense<0.000000e+00> : vector<16x128xf32>
    %3 = tpu.matmul %1, %2, %cst {dimension_numbers = #tpu.dot_dimension_numbers<[1], [0], [0], [1], [0, 0, 1, 1], [], []>} : vector<16x32xbf16>, vector<32x128xbf16>, vector<16x128xf32> -> vector<16x128xf32>
    %c0_3 = arith.constant 0 : index
    %c0_4 = arith.constant 0 : index
    %4 = vector.load %arg3[%c0_3, %c0_4] : memref<1x128xf32, #tpu.memory_space<vmem>>, vector<1x128xf32>
    %5 = vector.broadcast %4 : vector<1x128xf32> to vector<16x128xf32>
    %6 = arith.addf %3, %5 : vector<16x128xf32>
    %cst_5 = arith.constant 0.000000e+00 : f32
    %7 = vector.broadcast %cst_5 : f32 to vector<16x128xf32>
    %8 = arith.maximumf %6, %7 : vector<16x128xf32>
    %9 = arith.truncf %8 : vector<16x128xf32> to vector<16x128xbf16>
    %c0_6 = arith.constant 0 : index
    %c0_7 = arith.constant 0 : index
    %10 = vector.load %arg4[%c0_6, %c0_7] : memref<128x128xbf16, #tpu.memory_space<vmem>>, vector<128x128xbf16>
    %cst_8 = arith.constant dense<0.000000e+00> : vector<16x128xf32>
    %11 = tpu.matmul %9, %10, %cst_8 {dimension_numbers = #tpu.dot_dimension_numbers<[1], [0], [0], [1], [0, 0, 1, 1], [], []>} : vector<16x128xbf16>, vector<128x128xbf16>, vector<16x128xf32> -> vector<16x128xf32>
    %c0_9 = arith.constant 0 : index
    %c0_10 = arith.constant 0 : index
    %12 = vector.load %arg5[%c0_9, %c0_10] : memref<1x128xf32, #tpu.memory_space<vmem>>, vector<1x128xf32>
    %13 = vector.broadcast %12 : vector<1x128xf32> to vector<16x128xf32>
    %14 = arith.addf %11, %13 : vector<16x128xf32>
    %c0_11 = arith.constant 0 : index
    %c0_12 = arith.constant 0 : index
    %15 = vector.load %arg6[%c0_11, %c0_12] : memref<16x128xf32, #tpu.memory_space<vmem>>, vector<16x128xf32>
    tpu.vector_store %arg6[%c0_11, %c0_12], %14 {strides = array<i32>} : memref<16x128xf32, #tpu.memory_space<vmem>>, vector<16x128xf32>,
    return
  }
  func.func @transform_0(%arg0: i32) -> (i32, i32) {
    %c0_i32 = arith.constant 0 : i32
    %c0_i32_0 = arith.constant 0 : i32
    return %arg0, %c0_i32 : i32, i32
  }
  func.func @transform_1(%arg0: i32) -> (i32, i32) {
    %c0_i32 = arith.constant 0 : i32
    %c0_i32_0 = arith.constant 0 : i32
    %c0_i32_1 = arith.constant 0 : i32
    return %c0_i32, %c0_i32_0 : i32, i32
  }
  func.func @transform_2(%arg0: i32) -> (i32, i32) {
    %c0_i32 = arith.constant 0 : i32
    %c0_i32_0 = arith.constant 0 : i32
    %c0_i32_1 = arith.constant 0 : i32
    return %c0_i32, %c0_i32_0 : i32, i32
  }
  func.func @transform_3(%arg0: i32) -> (i32, i32) {
    %c0_i32 = arith.constant 0 : i32
    %c0_i32_0 = arith.constant 0 : i32
    %c0_i32_1 = arith.constant 0 : i32
    return %c0_i32, %c0_i32_0 : i32, i32
  }
  func.func @transform_4(%arg0: i32) -> (i32, i32) {
    %c0_i32 = arith.constant 0 : i32
    %c0_i32_0 = arith.constant 0 : i32
    %c0_i32_1 = arith.constant 0 : i32
    return %c0_i32, %c0_i32_0 : i32, i32
  }
  func.func @transform_5(%arg0: i32) -> (i32, i32) {
    %c0_i32 = arith.constant 0 : i32
    %c0_i32_0 = arith.constant 0 : i32
    return %arg0, %c0_i32 : i32, i32
  }
}

module attributes {stable_mosaic.version = 11 : i64} {
  func.func @_mlp_kernel_fused(%arg0: i32, %arg1: memref<16x32xf32, #tpu.memory_space<vmem>>, %arg2: memref<32x128xbf16, #tpu.memory_space<vmem>>, %arg3: memref<1x128xf32, #tpu.memory_space<vmem>>, %arg4: memref<128x128xbf16, #tpu.memory_space<vmem>>, %arg5: memref<1x128xf32, #tpu.memory_space<vmem>>, %arg6: memref<16x128xf32, #tpu.memory_space<vmem>>) attributes {dimension_semantics = [#tpu.dimension_semantics<parallel>], iteration_bounds = array<i64: 1>, scalar_prefetch = 0 : i64, scratch_operands = 0 : i64, tpu.core_type = #tpu.core_type<tc>, window_params = [{transform_indices = @transform_0, window_bounds = array<i64: 16, 32>}, {pipeline_mode = #tpu.pipeline_mode<synchronous>, transform_indices = @transform_1, window_bounds = array<i64: 32, 128>}, {pipeline_mode = #tpu.pipeline_mode<synchronous>, transform_indices = @transform_2, window_bounds = array<i64: 1, 128>}, {pipeline_mode = #tpu.pipeline_mode<synchronous>, transform_indices = @transform_3, window_bounds = array<i64: 128, 128>}, {pipeline_mode = #tpu.pipeline_mode<synchronous>, transform_indices = @transform_4, window_bounds = array<i64: 1, 128>}, {transform_indices = @transform_5, window_bounds = array<i64: 16, 128>}]} {
    %c0 = arith.constant 0 : index
    %c0_0 = arith.constant 0 : index
    %0 = vector.load %arg1[%c0, %c0_0] : memref<16x32xf32, #tpu.memory_space<vmem>>, vector<16x32xf32>
    %1 = arith.truncf %0 : vector<16x32xf32> to vector<16x32xbf16>
    %c0_1 = arith.constant 0 : index
    %c0_2 = arith.constant 0 : index
    %2 = vector.load %arg2[%c0_1, %c0_2] : memref<32x128xbf16, #tpu.memory_space<vmem>>, vector<32x128xbf16>
    %cst = arith.constant dense<0.000000e+00> : vector<16x128xf32>
    %3 = tpu.matmul %1, %2, %cst {dimension_numbers = #tpu.dot_dimension_numbers<[1], [0], [0], [1], [0, 0, 1, 1], [], []>} : vector<16x32xbf16>, vector<32x128xbf16>, vector<16x128xf32> -> vector<16x128xf32>
    %c0_3 = arith.constant 0 : index
    %c0_4 = arith.constant 0 : index
    %4 = vector.load %arg3[%c0_3, %c0_4] : memref<1x128xf32, #tpu.memory_space<vmem>>, vector<1x128xf32>
    %5 = vector.broadcast %4 : vector<1x128xf32> to vector<16x128xf32>
    %6 = arith.addf %3, %5 : vector<16x128xf32>
    %cst_5 = arith.constant 0.000000e+00 : f32
    %7 = vector.broadcast %cst_5 : f32 to vector<16x128xf32>
    %8 = arith.maximumf %6, %7 : vector<16x128xf32>
    %9 = arith.truncf %8 : vector<16x128xf32> to vector<16x128xbf16>
    %c0_6 = arith.constant 0 : index
    %c0_7 = arith.constant 0 : index
    %10 = vector.load %arg4[%c0_6, %c0_7] : memref<128x128xbf16, #tpu.memory_space<vmem>>, vector<128x128xbf16>
    %cst_8 = arith.constant dense<0.000000e+00> : vector<16x128xf32>
    %11 = tpu.matmul %9, %10, %cst_8 {dimension_numbers = #tpu.dot_dimension_numbers<[1], [0], [0], [1], [0, 0, 1, 1], [], []>} : vector<16x128xbf16>, vector<128x128xbf16>, vector<16x128xf32> -> vector<16x128xf32>
    %c0_9 = arith.constant 0 : index
    %c0_10 = arith.constant 0 : index
    %12 = vector.load %arg5[%c0_9, %c0_10] : memref<1x128xf32, #tpu.memory_space<vmem>>, vector<1x128xf32>
    %13 = vector.broadcast %12 : vector<1x128xf32> to vector<16x128xf32>
    %14 = arith.addf %11, %13 : vector<16x128xf32>
    %c0_11 = arith.constant 0 : index
    %c0_12 = arith.constant 0 : index
    %15 = vector.load %arg6[%c0_11, %c0_12] : memref<16x128xf32, #tpu.memory_space<vmem>>, vector<16x128xf32>
    tpu.vector_store %arg6[%c0_11, %c0_12], %14 {strides = array<i32>} : memref<16x128xf32, #tpu.memory_space<vmem>>, vector<16x128xf32>,
    return
  }
  func.func @transform_0(%arg0: i32) -> (i32, i32) {
    %c0_i32 = arith.constant 0 : i32
    %c0_i32_0 = arith.constant 0 : i32
    return %arg0, %c0_i32 : i32, i32
  }
  func.func @transform_1(%arg0: i32) -> (i32, i32) {
    %c0_i32 = arith.constant 0 : i32
    %c0_i32_0 = arith.constant 0 : i32
    %c0_i32_1 = arith.constant 0 : i32
    return %c0_i32, %c0_i32_0 : i32, i32
  }
  func.func @transform_2(%arg0: i32) -> (i32, i32) {
    %c0_i32 = arith.constant 0 : i32
    %c0_i32_0 = arith.constant 0 : i32
    %c0_i32_1 = arith.constant 0 : i32
    return %c0_i32, %c0_i32_0 : i32, i32
  }
  func.func @transform_3(%arg0: i32) -> (i32, i32) {
    %c0_i32 = arith.constant 0 : i32
    %c0_i32_0 = arith.constant 0 : i32
    %c0_i32_1 = arith.constant 0 : i32
    return %c0_i32, %c0_i32_0 : i32, i32
  }
  func.func @transform_4(%arg0: i32) -> (i32, i32) {
    %c0_i32 = arith.constant 0 : i32
    %c0_i32_0 = arith.constant 0 : i32
    %c0_i32_1 = arith.constant 0 : i32
    return %c0_i32, %c0_i32_0 : i32, i32
  }
  func.func @transform_5(%arg0: i32) -> (i32, i32) {
    %c0_i32 = arith.constant 0 : i32
    %c0_i32_0 = arith.constant 0 : i32
    return %arg0, %c0_i32 : i32, i32
  }
}

</mosaic_0001>

<llo_original>
// kernel: mlp_projection.1
$region0: #{mlp_projection.1}
  #allocation0 [shape = 'u32[]', space=smem, size = 0x4, offset = 0x4, fixed_abs, tag = 'smem constant byte address 0x4 - core index']
  #allocation1 [shape = 'u32[144,128]{1,0:T(1,128)}', space=vmem, size = 0x12000, scoped, tag = 'internal scratch']
  %s0 = inlined_call_operand.vmem [shape: f32[16,32], index: 0, kind: input, shape index: {}]
  %s1 = inlined_call_operand.vmem [shape: bf16[32,128], index: 1, kind: input, shape index: {}]
  %s2 = inlined_call_operand.vmem [shape: f32[1,128], index: 2, kind: input, shape index: {}]
  %s3 = inlined_call_operand.vmem [shape: bf16[128,128], index: 3, kind: input, shape index: {}]
  %s4 = inlined_call_operand.vmem [shape: f32[1,128], index: 4, kind: input, shape index: {}]
  %s5 = inlined_call_operand.hbm [shape: f32[16,128], index: 5, kind: output, shape index: {}]
  %s6 = sld [smem:[#allocation0]]
  $region30: #{mlp_projection.1} parent=0
    _
  %s8 = ssub.s32 1, %s6
  %s9 = scalar_select 0, %s8, %s6
  $region1: #{mlp_projection.1} parent=0
    #allocation2 [shape = 'u8[8192]{0}', space=vmem, size = 0x2000, scoped, tag = 'output window, operand 0, single buffered']
    #allocation3 [shape = 's32[1]{0}', space=sflag, size = 0x4, scoped, tag = 'scoped memory for mlp_projection.1']
    %10 = vsyncpa [#allocation3], 0
    // Predicated region
    $region2: #{mlp_projection.1} parent=1 // pred_check
      _
    $region3: #{mlp_projection.1} parent=1 // pred_check_branch
      %12 = sbr.rel (0) target = $region5
    $region4: #{mlp_projection.1} parent=1 // pred_region
      _
    $region5: #{mlp_projection.1} parent=1 // pred_fallthru
      _
    // Predicated region
    $region6: #{mlp_projection.1} parent=1 // pred_check
      _
    $region7: #{mlp_projection.1} parent=1 // pred_check_branch
      %14 = sbr.rel (0) target = $region9
    $region8: #{mlp_projection.1} parent=1 // pred_region
      _
    $region9: #{mlp_projection.1} parent=1 // pred_fallthru
      _
    // Predicated region
    $region10: #{mlp_projection.1} parent=1 // pred_check
      _
    $region11: #{mlp_projection.1} parent=1 // pred_check_branch
      %16 = sbr.rel (0) target = $region13
    $region12: #{mlp_projection.1} parent=1 // pred_region
      _
    $region13: #{mlp_projection.1} parent=1 // pred_fallthru
      _
    // Predicated region
    $region14: #{mlp_projection.1} parent=1 // pred_check
      _
    $region15: #{mlp_projection.1} parent=1 // pred_check_branch
      %18 = sbr.rel (0) target = $region17
    $region16: #{mlp_projection.1} parent=1 // pred_region
      _
    $region17: #{mlp_projection.1} parent=1 // pred_fallthru
      _
    // Predicated region
    $region18: #{mlp_projection.1} parent=1 // pred_check
      _
    $region19: #{mlp_projection.1} parent=1 // pred_check_branch
      %20 = sbr.rel (0) target = $region21
    $region20: #{mlp_projection.1} parent=1 // pred_region
      _
    $region21: #{mlp_projection.1} parent=1 // pred_fallthru
      _
    %v22 = vld [vmem:[%s0] sm:$0xff]
    %v23 = vld [vmem:[%s0 + $0x8] sm:$0xff]
    %v24 = vpack.c.bf16 %v23, %v22
    %v25 = vld [vmem:[%s1] sm:$0xf]
    %v26 = vld [vmem:[%s1 + $0x4] sm:$0xf]
    %v27 = vld [vmem:[%s1 + $0x8] sm:$0xf]
    %v28 = vld [vmem:[%s1 + $0xc] sm:$0xf]
    %v29 = vld [vmem:[%s2] sm:$0x1]
    %v31 = vlaneseq
    %v32 = vshrl.u32 %v31, 7
    %v33 = vsub.s32 0, %v32
    %v34 = vrot.slane %v29, %v33
    %v40 = vunpack.c.l.b16 %v25
    %v41 = vunpack.c.l.b16 %v26
    %v42 = vunpack.c.l.b16 %v27
    %v43 = vunpack.c.l.b16 %v28
    %v44 = vpack.c.b16 %v41, %v40
    %v45 = vpack.c.b16 %v43, %v42
    %vm48 = vcmask 261120
    %v50 = vsel %vm48, %v24, 0
    %52 = vmatprep.subr.bf16.mxu0 0
    %53 = vmatpush1.bf16.msra.mxu0 0
    %54 = vmatprep.subr.bf16.mxu0 0
    %55 = vmatpush1.bf16.msra.mxu0 0
    %56 = vmatprep.subr.bf16.mxu0 0
    %57 = vmatpush1.bf16.msra.mxu0 0
    %58 = vmatprep.subr.bf16.mxu0 0
    %59 = vmatpush1.bf16.msra.mxu0 0
    %60 = vmatprep.subr.bf16.mxu0 0
    %61 = vmatpush1.bf16.msra.mxu0 0
    %62 = vmatprep.subr.bf16.mxu0 0
    %63 = vmatpush1.bf16.msra.mxu0 0
    %64 = vmatprep.subr.bf16.mxu0 0
    %65 = vmatpush1.bf16.msra.mxu0 %v45
    %66 = vmatprep.subr.bf16.mxu0 0
    %67 = vmatpush1.bf16.msra.mxu0 %v44
    %68 = vmatprep.subr.bf16.mxu0 0
    %69 = vmatpush2.bf16.msra.mxu0 0
    %70 = vmatprep.subr.bf16.mxu0 0
    %71 = vmatpush2.bf16.msra.mxu0 0
    %72 = vmatprep.subr.bf16.mxu0 0
    %73 = vmatpush2.bf16.msra.mxu0 0
    %74 = vmatprep.subr.bf16.mxu0 0
    %75 = vmatpush2.bf16.msra.mxu0 0
    %76 = vmatprep.subr.bf16.mxu0 0
    %77 = vmatpush2.bf16.msra.mxu0 0
    %78 = vmatprep.subr.bf16.mxu0 0
    %79 = vmatpush2.bf16.msra.mxu0 0
    %80 = vmatprep.subr.bf16.mxu0 0
    %81 = vmatpush2.bf16.msra.mxu0 0
    %82 = vmatprep.subr.bf16.mxu0 0
    %83 = vmatpush2.bf16.msra.mxu0 0
    %84 = vmatprep.mubr.bf16.mxu0 0
    %85 = vmatmul.mubr.bf16.gmra.mxu0 %v50
    %v86 = vpop.f32.mrf.mxu0
    %v87 = vadd.f32 %v34, %v86
    %v88 = vpop.f32.mrf.mxu0
    %v89 = vpop.f32.mrf.mxu0
    %v90 = vadd.f32 %v34, %v89
    %v91 = vpop.f32.mrf.mxu0
    %92 = vdwg.mxu0
    %v93 = vmax.f32 %v87, 0.0
    %v94 = vmax.f32 %v90, 0.0
    %v95 = vpack.c.bf16 %v94, %v93
    %v96 = vld [vmem:[%s3] sm:$0xf]
    %v97 = vld [vmem:[%s3 + $0x4] sm:$0xf]
    %v98 = vld [vmem:[%s3 + $0x8] sm:$0xf]
    %v99 = vld [vmem:[%s3 + $0xc] sm:$0xf]
    %v100 = vld [vmem:[%s3 + $0x10] sm:$0xf]
    %v101 = vld [vmem:[%s3 + $0x14] sm:$0xf]
    %v102 = vld [vmem:[%s3 + $0x18] sm:$0xf]
    %v103 = vld [vmem:[%s3 + $0x1c] sm:$0xf]
    %v104 = vld [vmem:[%s3 + $0x20] sm:$0xf]
    %v105 = vld [vmem:[%s3 + $0x24] sm:$0xf]
    %v106 = vld [vmem:[%s3 + $0x28] sm:$0xf]
    %v107 = vld [vmem:[%s3 + $0x2c] sm:$0xf]
    %v108 = vld [vmem:[%s3 + $0x30] sm:$0xf]
    %v109 = vld [vmem:[%s3 + $0x34] sm:$0xf]
    %v110 = vld [vmem:[%s3 + $0x38] sm:$0xf]
    %v111 = vld [vmem:[%s3 + $0x3c] sm:$0xf]
    %v112 = vld [vmem:[%s4] sm:$0x1]
    %v114 = vlaneseq
    %v115 = vshrl.u32 %v114, 7
    %v116 = vsub.s32 0, %v115
    %v117 = vrot.slane %v112, %v116
    %v135 = vunpack.c.l.b16 %v96
    %v136 = vunpack.c.l.b16 %v97
    %v137 = vunpack.c.l.b16 %v98
    %v138 = vunpack.c.l.b16 %v99
    %v139 = vunpack.c.l.b16 %v100
    %v140 = vunpack.c.l.b16 %v101
    %v141 = vunpack.c.l.b16 %v102
    %v142 = vunpack.c.l.b16 %v103
    %v143 = vunpack.c.l.b16 %v104
    %v144 = vunpack.c.l.b16 %v105
    %v145 = vunpack.c.l.b16 %v106
    %v146 = vunpack.c.l.b16 %v107
    %v147 = vunpack.c.l.b16 %v108
    %v148 = vunpack.c.l.b16 %v109
    %v149 = vunpack.c.l.b16 %v110
    %v150 = vunpack.c.l.b16 %v111
    %v151 = vpack.c.b16 %v136, %v135
    %v152 = vpack.c.b16 %v138, %v137
    %v153 = vpack.c.b16 %v140, %v139
    %v154 = vpack.c.b16 %v142, %v141
    %v155 = vpack.c.b16 %v144, %v143
    %v156 = vpack.c.b16 %v146, %v145
    %v157 = vpack.c.b16 %v148, %v147
    %v158 = vpack.c.b16 %v150, %v149
    %167 = vmatprep.subr.bf16.mxu0 0
    %168 = vmatpush1.bf16.msra.mxu0 %v158
    %169 = vmatprep.subr.bf16.mxu0 0
    %170 = vmatpush1.bf16.msra.mxu0 %v157
    %171 = vmatprep.subr.bf16.mxu0 0
    %172 = vmatpush1.bf16.msra.mxu0 %v156
    %173 = vmatprep.subr.bf16.mxu0 0
    %174 = vmatpush1.bf16.msra.mxu0 %v155
    %175 = vmatprep.subr.bf16.mxu0 0
    %176 = vmatpush1.bf16.msra.mxu0 %v154
    %177 = vmatprep.subr.bf16.mxu0 0
    %178 = vmatpush1.bf16.msra.mxu0 %v153
    %179 = vmatprep.subr.bf16.mxu0 0
    %180 = vmatpush1.bf16.msra.mxu0 %v152
    %181 = vmatprep.subr.bf16.mxu0 0
    %182 = vmatpush1.bf16.msra.mxu0 %v151
    %183 = vmatprep.subr.bf16.mxu0 0
    %184 = vmatpush2.bf16.msra.mxu0 0
    %185 = vmatprep.subr.bf16.mxu0 0
    %186 = vmatpush2.bf16.msra.mxu0 0
    %187 = vmatprep.subr.bf16.mxu0 0
    %188 = vmatpush2.bf16.msra.mxu0 0
    %189 = vmatprep.subr.bf16.mxu0 0
    %190 = vmatpush2.bf16.msra.mxu0 0
    %191 = vmatprep.subr.bf16.mxu0 0
    %192 = vmatpush2.bf16.msra.mxu0 0
    %193 = vmatprep.subr.bf16.mxu0 0
    %194 = vmatpush2.bf16.msra.mxu0 0
    %195 = vmatprep.subr.bf16.mxu0 0
    %196 = vmatpush2.bf16.msra.mxu0 0
    %197 = vmatprep.subr.bf16.mxu0 0
    %198 = vmatpush2.bf16.msra.mxu0 0
    %199 = vmatprep.mubr.bf16.mxu0 0
    %200 = vmatmul.mubr.bf16.gmra.mxu0 %v95
    %v201 = vpop.f32.mrf.mxu0
    %v202 = vadd.f32 %v117, %v201
    %v203 = vpop.f32.mrf.mxu0
    %v204 = vpop.f32.mrf.mxu0
    %v205 = vadd.f32 %v117, %v204
    %v206 = vpop.f32.mrf.mxu0
    %207 = vdwg.mxu0
    %208 = vst [vmem:[#allocation2] sm:$0xff] %v202
    %209 = vst [vmem:[#allocation2 + $0x8] sm:$0xff] %v205
    // Predicated region
    $region22: #{mlp_projection.1} parent=1 // pred_check
      _
    $region23: #{mlp_projection.1} parent=1 // pred_check_branch
      %211 = sbr.rel (0) target = $region25
    $region24: #{mlp_projection.1} parent=1 // pred_region
      %s213 = ssub.s32 256, 256
      %214 = vsyncadd [#allocation3], %s213
      %s215 = sshll.u32 [#allocation2], 4
      %s216 = int_to_ptr.vmem [resolvable:$true] %s215
      %221 = dma.vmem_to_hbm [thread:$0]  %s216, 256, %s5, [#allocation3], 128, 128, 8
    $region25: #{mlp_projection.1} parent=1 // pred_fallthru
      _
    // Predicated region
    $region26: #{mlp_projection.1} parent=1 // pred_check
      _
    $region27: #{mlp_projection.1} parent=1 // pred_check_branch
      %223 = sbr.rel (0) target = $region29
    $region28: #{mlp_projection.1} parent=1 // pred_region
      %224 = dma.done [#allocation3], 256
    $region29: #{mlp_projection.1} parent=1 // pred_fallthru
      _
    %225 = vsyncpa [#allocation3], 1

// kernel: mlp_projection.1
$region0: #{mlp_projection.1}
  #allocation0 [shape = 'u32[]', space=smem, size = 0x4, offset = 0x4, fixed_abs, tag = 'smem constant byte address 0x4 - core index']
  #allocation1 [shape = 'u32[144,128]{1,0:T(1,128)}', space=vmem, size = 0x12000, scoped, tag = 'internal scratch']
  %s0 = inlined_call_operand.vmem [shape: f32[16,32], index: 0, kind: input, shape index: {}]
  %s1 = inlined_call_operand.vmem [shape: bf16[32,128], index: 1, kind: input, shape index: {}]
  %s2 = inlined_call_operand.vmem [shape: f32[1,128], index: 2, kind: input, shape index: {}]
  %s3 = inlined_call_operand.vmem [shape: bf16[128,128], index: 3, kind: input, shape index: {}]
  %s4 = inlined_call_operand.vmem [shape: f32[1,128], index: 4, kind: input, shape index: {}]
  %s5 = inlined_call_operand.hbm [shape: f32[16,128], index: 5, kind: output, shape index: {}]
  %s6 = sld [smem:[#allocation0]]
  $region30: #{mlp_projection.1} parent=0
    _
  %s8 = ssub.s32 1, %s6
  %s9 = scalar_select 0, %s8, %s6
  $region1: #{mlp_projection.1} parent=0
    #allocation2 [shape = 'u8[8192]{0}', space=vmem, size = 0x2000, scoped, tag = 'output window, operand 0, single buffered']
    #allocation3 [shape = 's32[1]{0}', space=sflag, size = 0x4, scoped, tag = 'scoped memory for mlp_projection.1']
    %10 = vsyncpa [#allocation3], 0
    // Predicated region
    $region2: #{mlp_projection.1} parent=1 // pred_check
      _
    $region3: #{mlp_projection.1} parent=1 // pred_check_branch
      %12 = sbr.rel (0) target = $region5
    $region4: #{mlp_projection.1} parent=1 // pred_region
      _
    $region5: #{mlp_projection.1} parent=1 // pred_fallthru
      _
    // Predicated region
    $region6: #{mlp_projection.1} parent=1 // pred_check
      _
    $region7: #{mlp_projection.1} parent=1 // pred_check_branch
      %14 = sbr.rel (0) target = $region9
    $region8: #{mlp_projection.1} parent=1 // pred_region
      _
    $region9: #{mlp_projection.1} parent=1 // pred_fallthru
      _
    // Predicated region
    $region10: #{mlp_projection.1} parent=1 // pred_check
      _
    $region11: #{mlp_projection.1} parent=1 // pred_check_branch
      %16 = sbr.rel (0) target = $region13
    $region12: #{mlp_projection.1} parent=1 // pred_region
      _
    $region13: #{mlp_projection.1} parent=1 // pred_fallthru
      _
    // Predicated region
    $region14: #{mlp_projection.1} parent=1 // pred_check
      _
    $region15: #{mlp_projection.1} parent=1 // pred_check_branch
      %18 = sbr.rel (0) target = $region17
    $region16: #{mlp_projection.1} parent=1 // pred_region
      _
    $region17: #{mlp_projection.1} parent=1 // pred_fallthru
      _
    // Predicated region
    $region18: #{mlp_projection.1} parent=1 // pred_check
      _
    $region19: #{mlp_projection.1} parent=1 // pred_check_branch
      %20 = sbr.rel (0) target = $region21
    $region20: #{mlp_projection.1} parent=1 // pred_region
      _
    $region21: #{mlp_projection.1} parent=1 // pred_fallthru
      _
    %v22 = vld [vmem:[%s0] sm:$0xff]
    %v23 = vld [vmem:[%s0 + $0x8] sm:$0xff]
    %v24 = vpack.c.bf16 %v23, %v22
    %v25 = vld [vmem:[%s1] sm:$0xf]
    %v26 = vld [vmem:[%s1 + $0x4] sm:$0xf]
    %v27 = vld [vmem:[%s1 + $0x8] sm:$0xf]
    %v28 = vld [vmem:[%s1 + $0xc] sm:$0xf]
    %v29 = vld [vmem:[%s2] sm:$0x1]
    %v31 = vlaneseq
    %v32 = vshrl.u32 %v31, 7
    %v33 = vsub.s32 0, %v32
    %v34 = vrot.slane %v29, %v33
    %v40 = vunpack.c.l.b16 %v25
    %v41 = vunpack.c.l.b16 %v26
    %v42 = vunpack.c.l.b16 %v27
    %v43 = vunpack.c.l.b16 %v28
    %v44 = vpack.c.b16 %v41, %v40
    %v45 = vpack.c.b16 %v43, %v42
    %vm48 = vcmask 261120
    %v50 = vsel %vm48, %v24, 0
    %52 = vmatprep.subr.bf16.mxu0 0
    %53 = vmatpush1.bf16.msra.mxu0 0
    %54 = vmatprep.subr.bf16.mxu0 0
    %55 = vmatpush1.bf16.msra.mxu0 0
    %56 = vmatprep.subr.bf16.mxu0 0
    %57 = vmatpush1.bf16.msra.mxu0 0
    %58 = vmatprep.subr.bf16.mxu0 0
    %59 = vmatpush1.bf16.msra.mxu0 0
    %60 = vmatprep.subr.bf16.mxu0 0
    %61 = vmatpush1.bf16.msra.mxu0 0
    %62 = vmatprep.subr.bf16.mxu0 0
    %63 = vmatpush1.bf16.msra.mxu0 0
    %64 = vmatprep.subr.bf16.mxu0 0
    %65 = vmatpush1.bf16.msra.mxu0 %v45
    %66 = vmatprep.subr.bf16.mxu0 0
    %67 = vmatpush1.bf16.msra.mxu0 %v44
    %68 = vmatprep.subr.bf16.mxu0 0
    %69 = vmatpush2.bf16.msra.mxu0 0
    %70 = vmatprep.subr.bf16.mxu0 0
    %71 = vmatpush2.bf16.msra.mxu0 0
    %72 = vmatprep.subr.bf16.mxu0 0
    %73 = vmatpush2.bf16.msra.mxu0 0
    %74 = vmatprep.subr.bf16.mxu0 0
    %75 = vmatpush2.bf16.msra.mxu0 0
    %76 = vmatprep.subr.bf16.mxu0 0
    %77 = vmatpush2.bf16.msra.mxu0 0
    %78 = vmatprep.subr.bf16.mxu0 0
    %79 = vmatpush2.bf16.msra.mxu0 0
    %80 = vmatprep.subr.bf16.mxu0 0
    %81 = vmatpush2.bf16.msra.mxu0 0
    %82 = vmatprep.subr.bf16.mxu0 0
    %83 = vmatpush2.bf16.msra.mxu0 0
    %84 = vmatprep.mubr.bf16.mxu0 0
    %85 = vmatmul.mubr.bf16.gmra.mxu0 %v50
    %v86 = vpop.f32.mrf.mxu0
    %v87 = vadd.f32 %v34, %v86
    %v88 = vpop.f32.mrf.mxu0
    %v89 = vpop.f32.mrf.mxu0
    %v90 = vadd.f32 %v34, %v89
    %v91 = vpop.f32.mrf.mxu0
    %92 = vdwg.mxu0
    %v93 = vmax.f32 %v87, 0.0
    %v94 = vmax.f32 %v90, 0.0
    %v95 = vpack.c.bf16 %v94, %v93
    %v96 = vld [vmem:[%s3] sm:$0xf]
    %v97 = vld [vmem:[%s3 + $0x4] sm:$0xf]
    %v98 = vld [vmem:[%s3 + $0x8] sm:$0xf]
    %v99 = vld [vmem:[%s3 + $0xc] sm:$0xf]
    %v100 = vld [vmem:[%s3 + $0x10] sm:$0xf]
    %v101 = vld [vmem:[%s3 + $0x14] sm:$0xf]
    %v102 = vld [vmem:[%s3 + $0x18] sm:$0xf]
    %v103 = vld [vmem:[%s3 + $0x1c] sm:$0xf]
    %v104 = vld [vmem:[%s3 + $0x20] sm:$0xf]
    %v105 = vld [vmem:[%s3 + $0x24] sm:$0xf]
    %v106 = vld [vmem:[%s3 + $0x28] sm:$0xf]
    %v107 = vld [vmem:[%s3 + $0x2c] sm:$0xf]
    %v108 = vld [vmem:[%s3 + $0x30] sm:$0xf]
    %v109 = vld [vmem:[%s3 + $0x34] sm:$0xf]
    %v110 = vld [vmem:[%s3 + $0x38] sm:$0xf]
    %v111 = vld [vmem:[%s3 + $0x3c] sm:$0xf]
    %v112 = vld [vmem:[%s4] sm:$0x1]
    %v114 = vlaneseq
    %v115 = vshrl.u32 %v114, 7
    %v116 = vsub.s32 0, %v115
    %v117 = vrot.slane %v112, %v116
    %v135 = vunpack.c.l.b16 %v96
    %v136 = vunpack.c.l.b16 %v97
    %v137 = vunpack.c.l.b16 %v98
    %v138 = vunpack.c.l.b16 %v99
    %v139 = vunpack.c.l.b16 %v100
    %v140 = vunpack.c.l.b16 %v101
    %v141 = vunpack.c.l.b16 %v102
    %v142 = vunpack.c.l.b16 %v103
    %v143 = vunpack.c.l.b16 %v104
    %v144 = vunpack.c.l.b16 %v105
    %v145 = vunpack.c.l.b16 %v106
    %v146 = vunpack.c.l.b16 %v107
    %v147 = vunpack.c.l.b16 %v108
    %v148 = vunpack.c.l.b16 %v109
    %v149 = vunpack.c.l.b16 %v110
    %v150 = vunpack.c.l.b16 %v111
    %v151 = vpack.c.b16 %v136, %v135
    %v152 = vpack.c.b16 %v138, %v137
    %v153 = vpack.c.b16 %v140, %v139
    %v154 = vpack.c.b16 %v142, %v141
    %v155 = vpack.c.b16 %v144, %v143
    %v156 = vpack.c.b16 %v146, %v145
    %v157 = vpack.c.b16 %v148, %v147
    %v158 = vpack.c.b16 %v150, %v149
    %167 = vmatprep.subr.bf16.mxu0 0
    %168 = vmatpush1.bf16.msra.mxu0 %v158
    %169 = vmatprep.subr.bf16.mxu0 0
    %170 = vmatpush1.bf16.msra.mxu0 %v157
    %171 = vmatprep.subr.bf16.mxu0 0
    %172 = vmatpush1.bf16.msra.mxu0 %v156
    %173 = vmatprep.subr.bf16.mxu0 0
    %174 = vmatpush1.bf16.msra.mxu0 %v155
    %175 = vmatprep.subr.bf16.mxu0 0
    %176 = vmatpush1.bf16.msra.mxu0 %v154
    %177 = vmatprep.subr.bf16.mxu0 0
    %178 = vmatpush1.bf16.msra.mxu0 %v153
    %179 = vmatprep.subr.bf16.mxu0 0
    %180 = vmatpush1.bf16.msra.mxu0 %v152
    %181 = vmatprep.subr.bf16.mxu0 0
    %182 = vmatpush1.bf16.msra.mxu0 %v151
    %183 = vmatprep.subr.bf16.mxu0 0
    %184 = vmatpush2.bf16.msra.mxu0 0
    %185 = vmatprep.subr.bf16.mxu0 0
    %186 = vmatpush2.bf16.msra.mxu0 0
    %187 = vmatprep.subr.bf16.mxu0 0
    %188 = vmatpush2.bf16.msra.mxu0 0
    %189 = vmatprep.subr.bf16.mxu0 0
    %190 = vmatpush2.bf16.msra.mxu0 0
    %191 = vmatprep.subr.bf16.mxu0 0
    %192 = vmatpush2.bf16.msra.mxu0 0
    %193 = vmatprep.subr.bf16.mxu0 0
    %194 = vmatpush2.bf16.msra.mxu0 0
    %195 = vmatprep.subr.bf16.mxu0 0
    %196 = vmatpush2.bf16.msra.mxu0 0
    %197 = vmatprep.subr.bf16.mxu0 0
    %198 = vmatpush2.bf16.msra.mxu0 0
    %199 = vmatprep.mubr.bf16.mxu0 0
    %200 = vmatmul.mubr.bf16.gmra.mxu0 %v95
    %v201 = vpop.f32.mrf.mxu0
    %v202 = vadd.f32 %v117, %v201
    %v203 = vpop.f32.mrf.mxu0
    %v204 = vpop.f32.mrf.mxu0
    %v205 = vadd.f32 %v117, %v204
    %v206 = vpop.f32.mrf.mxu0
    %207 = vdwg.mxu0
    %208 = vst [vmem:[#allocation2] sm:$0xff] %v202
    %209 = vst [vmem:[#allocation2 + $0x8] sm:$0xff] %v205
    // Predicated region
    $region22: #{mlp_projection.1} parent=1 // pred_check
      _
    $region23: #{mlp_projection.1} parent=1 // pred_check_branch
      %211 = sbr.rel (0) target = $region25
    $region24: #{mlp_projection.1} parent=1 // pred_region
      %s213 = ssub.s32 256, 256
      %214 = vsyncadd [#allocation3], %s213
      %s215 = sshll.u32 [#allocation2], 4
      %s216 = int_to_ptr.vmem [resolvable:$true] %s215
      %221 = dma.vmem_to_hbm [thread:$0]  %s216, 256, %s5, [#allocation3], 128, 128, 8
    $region25: #{mlp_projection.1} parent=1 // pred_fallthru
      _
    // Predicated region
    $region26: #{mlp_projection.1} parent=1 // pred_check
      _
    $region27: #{mlp_projection.1} parent=1 // pred_check_branch
      %223 = sbr.rel (0) target = $region29
    $region28: #{mlp_projection.1} parent=1 // pred_region
      %224 = dma.done [#allocation3], 256
    $region29: #{mlp_projection.1} parent=1 // pred_fallthru
      _
    %225 = vsyncpa [#allocation3], 1

</llo_original>
